<compile_context>
chip_gen: v5e
topology: v5e:2x2
jax: 0.10.0
libtpu: 0.0.40
codegen_flags: <defaults>
</compile_context>

<pallas_src>
import functools

import numpy as np
import jax
import jax.numpy as jnp
from jax.experimental import pallas as pl
from jax.experimental.pallas import tpu as pltpu


def _pick_row_fold(H, WC):
    """How many image rows to fold into the lane axis (target >=128 lanes)."""
    r = max(1, 128 // WC)
    while r > 1 and H % r:
        r -= 1
    return r


def _build_shift_mats(w_oihw, W, R):
    """Host-side, one-time weight re-layout.

    Returns M of shape (3, G, G), G = R*W*C, such that for the activation
    matrix X2 (H/R rows, G lanes) padded with one zero row-group above/below,
        conv_out_rowgroup[r] = sum_{gi=0..2} X2pad[r + gi] @ M[gi]
    reproduces a 3x3 'same' (zero-padded) cross-correlation, exactly like
    nn.Conv2d.  (Runs on the host with numpy; not meant to be jitted.)
    """
    C_out, C_in, _, _ = w_oihw.shape
    K = np.asarray(jnp.transpose(w_oihw, (2, 3, 1, 0)))  # (3, 3, Cin, Cout)
    G = R * W * C_in
    M = np.zeros((3, G, G), np.float32)
    for gi in range(3):
        g = gi - 1                      # row-group offset -1 / 0 / +1
        for ro in range(R):             # output row within the group
            for ri in range(R):         # input row within the (shifted) group
                kh = g * R + ri - ro + 1
                if kh < 0 or kh > 2:
                    continue
                for wo in range(W):
                    for kw in range(3):
                        wi = wo + kw - 1
                        if wi < 0 or wi >= W:   # zero padding along W
                            continue
                        M[gi,
                          (ri * W + wi) * C_in:(ri * W + wi + 1) * C_in,
                          (ro * W + wo) * C_out:(ro * W + wo + 1) * C_out] = K[kh, kw]
    return jnp.asarray(M)


def _resblock_kernel(x_ref, t1_ref, b1_ref, t2_ref, b2_ref, o_ref, xp_ref,
                     *, HR, G, IN0, cdt):
    """One image per grid step.

    x_ref  : (1, HR, G) f32   folded-row input (residual source)
    t*_ref : (3, G, G)  cdt   block-Toeplitz conv weights (row-group shifts)
    b*_ref : (1, G)     f32   biases tiled over the lane axis
    o_ref  : (1, HR, G) f32   output
    xp_ref : (IN0+HR+1, G) cdt VMEM scratch; interior rows [IN0, IN0+HR),
             1-row zero halo at IN0-1 and IN0+HR (rows < IN0-1 unused).
    """
    zero_row = jnp.zeros((1, G), cdt)
    # Zero only the 1-row halo (interior is fully overwritten below).
    xp_ref[pl.ds(IN0 - 1, 1), :] = zero_row
    xp_ref[pl.ds(IN0 + HR, 1), :] = zero_row

    x2d = x_ref[0]                                   # (HR, G) f32 residual
    x_cdt = x2d.astype(cdt)
    xp_ref[pl.ds(IN0, HR), :] = x_cdt                # aligned interior store

    # ---- conv1: 3 row-shifted matmuls, bias pre-loaded into the accumulator.
    # Middle tap (gi=1) reuses the in-register activations (no scratch reload).
    acc = jnp.broadcast_to(b1_ref[...].astype(jnp.float32), (HR, G))
    acc = acc + jnp.dot(x_cdt, t1_ref[1], preferred_element_type=jnp.float32)
    for gi in (0, 2):
        acc = acc + jnp.dot(xp_ref[pl.ds(IN0 - 1 + gi, HR), :], t1_ref[gi],
                            preferred_element_type=jnp.float32)

    # ReLU(conv1) written straight back into the scratch interior (halo stays 0).
    y_cdt = jnp.maximum(acc, 0.0).astype(cdt)
    xp_ref[pl.ds(IN0, HR), :] = y_cdt

    # ---- conv2 (middle tap again reuses the register value) ----
    acc = jnp.broadcast_to(b2_ref[...].astype(jnp.float32), (HR, G))
    acc = acc + jnp.dot(y_cdt, t2_ref[1], preferred_element_type=jnp.float32)
    for gi in (0, 2):
        acc = acc + jnp.dot(xp_ref[pl.ds(IN0 - 1 + gi, HR), :], t2_ref[gi],
                            preferred_element_type=jnp.float32)

    # ---- residual add + final ReLU (all f32 on the VPU) ----
    o_ref[0, :, :] = jnp.maximum(x2d + acc, 0.0).astype(o_ref.dtype)


def residual_block_pallas(x_nchw, w1_oihw, b1, w2_oihw, b2, *,
                          matmul_dtype=jnp.float32):
    """x_nchw: (B, C, H, W) f32; weights in PyTorch OIHW layout, biases (C,)."""
    B, C, H, W = x_nchw.shape
    R = _pick_row_fold(H, W * C)        # rows folded into the lane axis
    HR, G = H // R, R * W * C
    IN0 = 8                             # sublane-aligned start of scratch interior

    # Lane-dense activation layout: NCHW -> NHWC -> (B, H/R, R*W*C). The reshape
    # is a contiguous re-linearization (no data shuffle beyond the transpose).
    x2 = jnp.transpose(x_nchw, (0, 2, 3, 1)).reshape(B, HR, G)

    # One-time host-side weight/bias re-layout.
    t1 = _build_shift_mats(w1_oihw, W, R).astype(matmul_dtype)
    t2 = _build_shift_mats(w2_oihw, W, R).astype(matmul_dtype)
    b1g = jnp.tile(b1, R * W).reshape(1, G).astype(jnp.float32)
    b2g = jnp.tile(b2, R * W).reshape(1, G).astype(jnp.float32)

    kernel = functools.partial(_resblock_kernel, HR=HR, G=G, IN0=IN0,
                               cdt=matmul_dtype)

    wt_bytes = 2 * 3 * G * G * jnp.dtype(matmul_dtype).itemsize
    cost = pl.CostEstimate(
        flops=int(2 * 3 * 2 * B * HR * G * G),           # 2 convs x 3 taps
        transcendentals=0,
        bytes_accessed=int(2 * B * HR * G * 4 + wt_bytes + 2 * G * 4),
    )

    out2 = pl.pallas_call(
        kernel,
        out_shape=jax.ShapeDtypeStruct((B, HR, G), x2.dtype),
        grid_spec=pltpu.PrefetchScalarGridSpec(
            num_scalar_prefetch=0,
            grid=(B,),
            in_specs=[
                pl.BlockSpec((1, HR, G), lambda b: (b, 0, 0)),   # x
                pl.BlockSpec((3, G, G), lambda b: (0, 0, 0)),    # conv1 weights
                pl.BlockSpec((1, G), lambda b: (0, 0)),          # conv1 bias
                pl.BlockSpec((3, G, G), lambda b: (0, 0, 0)),    # conv2 weights
                pl.BlockSpec((1, G), lambda b: (0, 0)),          # conv2 bias
            ],
            out_specs=pl.BlockSpec((1, HR, G), lambda b: (b, 0, 0)),
            scratch_shapes=[pltpu.VMEM((IN0 + HR + 1, G), matmul_dtype)],
        ),
        compiler_params=pltpu.CompilerParams(
            dimension_semantics=("parallel",),
            vmem_limit_bytes=32 * 1024 * 1024,
        ),
        cost_estimate=cost,
    )(x2, t1, b1g, t2, b2g)

    return jnp.transpose(out2.reshape(B, H, W, C), (0, 3, 1, 2))   # back to NCHW


def residual_block_ref(x_nchw, w1_oihw, b1, w2_oihw, b2):
    """Pure-JAX reference matching PyTorch semantics (NCHW / OIHW)."""
    def conv(x, w, b):
        y = jax.lax.conv_general_dilated(
            x, w, window_strides=(1, 1), padding="SAME",
            dimension_numbers=("NCHW", "OIHW", "NCHW"))
        return y + b.reshape(1, -1, 1, 1)

    y = jax.nn.relu(conv(x_nchw, w1_oihw, b1))
    y = conv(y, w2_oihw, b2)
    return jax.nn.relu(x_nchw + y)


if __name__ == "__main__":
    B, C, H, W = 2, 4, 16, 16
    key = jax.random.PRNGKey(0)
    kx, k1, k2, k3, k4 = jax.random.split(key, 5)

    x = jax.random.normal(kx, (B, C, H, W), dtype=jnp.float32)
    w1 = 0.1 * jax.random.normal(k1, (C, C, 3, 3), dtype=jnp.float32)
    b1 = 0.1 * jax.random.normal(k2, (C,), dtype=jnp.float32)
    w2 = 0.1 * jax.random.normal(k3, (C, C, 3, 3), dtype=jnp.float32)
    b2 = 0.1 * jax.random.normal(k4, (C,), dtype=jnp.float32)

    ref = jax.block_until_ready(residual_block_ref(x, w1, b1, w2, b2))

    # f32 MXU operands: tight tolerance.
    out_f32 = jax.block_until_ready(
        residual_block_pallas(x, w1, b1, w2, b2, matmul_dtype=jnp.float32))
    assert out_f32.shape == (B, C, H, W)
    assert jnp.allclose(out_f32, ref, atol=1e-4, rtol=1e-4), "f32 mismatch vs reference"

    # bf16 MXU operands (v6e/v7x-preferred path), f32 accumulation/elementwise.
    out_bf16 = jax.block_until_ready(
        residual_block_pallas(x, w1, b1, w2, b2, matmul_dtype=jnp.bfloat16))
    assert jnp.allclose(out_bf16, ref, atol=5e-2, rtol=5e-2), "bf16 mismatch vs reference"

    print("KERNEL_OK")
</pallas_src>

<mosaic_0001>
module attributes {stable_mosaic.version = 11 : i64} {
  func.func @_resblock_kernel(%arg0: i32, %arg1: memref<1x8x128xf32, #tpu.memory_space<vmem>>, %arg2: memref<3x128x128xf32, #tpu.memory_space<vmem>>, %arg3: memref<1x128xf32, #tpu.memory_space<vmem>>, %arg4: memref<3x128x128xf32, #tpu.memory_space<vmem>>, %arg5: memref<1x128xf32, #tpu.memory_space<vmem>>, %arg6: memref<1x8x128xf32, #tpu.memory_space<vmem>>, %arg7: memref<17x128xf32, #tpu.memory_space<vmem>>) attributes {dimension_semantics = [#tpu.dimension_semantics<parallel>], iteration_bounds = array<i64: 2>, scalar_prefetch = 0 : i64, scratch_operands = 1 : i64, tpu.core_type = #tpu.core_type<tc>, window_params = [{transform_indices = @transform_0, window_bounds = array<i64: 1, 8, 128>}, {pipeline_mode = #tpu.pipeline_mode<synchronous>, transform_indices = @transform_1, window_bounds = array<i64: 3, 128, 128>}, {pipeline_mode = #tpu.pipeline_mode<synchronous>, transform_indices = @transform_2, window_bounds = array<i64: 1, 128>}, {pipeline_mode = #tpu.pipeline_mode<synchronous>, transform_indices = @transform_3, window_bounds = array<i64: 3, 128, 128>}, {pipeline_mode = #tpu.pipeline_mode<synchronous>, transform_indices = @transform_4, window_bounds = array<i64: 1, 128>}, {transform_indices = @transform_5, window_bounds = array<i64: 1, 8, 128>}]} {
    %cst = arith.constant 0.000000e+00 : f32
    %0 = vector.broadcast %cst : f32 to vector<1x128xf32>
    %c7 = arith.constant 7 : index
    %c0 = arith.constant 0 : index
    %1 = vector.load %arg7[%c7, %c0] : memref<17x128xf32, #tpu.memory_space<vmem>>, vector<1x128xf32>
    tpu.vector_store %arg7[%c7, %c0], %0 {strides = array<i32>} : memref<17x128xf32, #tpu.memory_space<vmem>>, vector<1x128xf32>,
    %c16 = arith.constant 16 : index
    %c0_0 = arith.constant 0 : index
    %2 = vector.load %arg7[%c16, %c0_0] : memref<17x128xf32, #tpu.memory_space<vmem>>, vector<1x128xf32>
    tpu.vector_store %arg7[%c16, %c0_0], %0 {strides = array<i32>} : memref<17x128xf32, #tpu.memory_space<vmem>>, vector<1x128xf32>,
    %c0_1 = arith.constant 0 : index
    %c0_2 = arith.constant 0 : index
    %c0_3 = arith.constant 0 : index
    %3 = vector.load %arg1[%c0_1, %c0_2, %c0_3] : memref<1x8x128xf32, #tpu.memory_space<vmem>>, vector<1x8x128xf32>
    %4 = vector.shape_cast %3 : vector<1x8x128xf32> to vector<8x128xf32>
    %c8 = arith.constant 8 : index
    %c0_4 = arith.constant 0 : index
    %5 = vector.load %arg7[%c8, %c0_4] : memref<17x128xf32, #tpu.memory_space<vmem>>, vector<8x128xf32>
    tpu.vector_store %arg7[%c8, %c0_4], %4 {strides = array<i32>} : memref<17x128xf32, #tpu.memory_space<vmem>>, vector<8x128xf32>,
    %c0_5 = arith.constant 0 : index
    %c0_6 = arith.constant 0 : index
    %6 = vector.load %arg3[%c0_5, %c0_6] : memref<1x128xf32, #tpu.memory_space<vmem>>, vector<1x128xf32>
    %7 = vector.shape_cast %6 : vector<1x128xf32> to vector<1x128xf32>
    %8 = vector.broadcast %7 : vector<1x128xf32> to vector<8x128xf32>
    %c1 = arith.constant 1 : index
    %c0_7 = arith.constant 0 : index
    %c0_8 = arith.constant 0 : index
    %9 = vector.load %arg2[%c1, %c0_7, %c0_8] : memref<3x128x128xf32, #tpu.memory_space<vmem>>, vector<1x128x128xf32>
    %10 = vector.shape_cast %9 : vector<1x128x128xf32> to vector<128x128xf32>
    %cst_9 = arith.constant dense<0.000000e+00> : vector<8x128xf32>
    %11 = tpu.matmul %4, %10, %cst_9 {dimension_numbers = #tpu.dot_dimension_numbers<[1], [0], [0], [1], [0, 0, 1, 1], [], []>} : vector<8x128xf32>, vector<128x128xf32>, vector<8x128xf32> -> vector<8x128xf32>
    %12 = arith.addf %8, %11 : vector<8x128xf32>
    %c7_10 = arith.constant 7 : index
    %c0_11 = arith.constant 0 : index
    %13 = vector.load %arg7[%c7_10, %c0_11] : memref<17x128xf32, #tpu.memory_space<vmem>>, vector<8x128xf32>
    %c0_12 = arith.constant 0 : index
    %c0_13 = arith.constant 0 : index
    %c0_14 = arith.constant 0 : index
    %14 = vector.load %arg2[%c0_12, %c0_13, %c0_14] : memref<3x128x128xf32, #tpu.memory_space<vmem>>, vector<1x128x128xf32>
    %15 = vector.shape_cast %14 : vector<1x128x128xf32> to vector<128x128xf32>
    %cst_15 = arith.constant dense<0.000000e+00> : vector<8x128xf32>
    %16 = tpu.matmul %13, %15, %cst_15 {dimension_numbers = #tpu.dot_dimension_numbers<[1], [0], [0], [1], [0, 0, 1, 1], [], []>} : vector<8x128xf32>, vector<128x128xf32>, vector<8x128xf32> -> vector<8x128xf32>
    %17 = arith.addf %12, %16 : vector<8x128xf32>
    %c9 = arith.constant 9 : index
    %c0_16 = arith.constant 0 : index
    %18 = vector.load %arg7[%c9, %c0_16] : memref<17x128xf32, #tpu.memory_space<vmem>>, vector<8x128xf32>
    %c2 = arith.constant 2 : index
    %c0_17 = arith.constant 0 : index
    %c0_18 = arith.constant 0 : index
    %19 = vector.load %arg2[%c2, %c0_17, %c0_18] : memref<3x128x128xf32, #tpu.memory_space<vmem>>, vector<1x128x128xf32>
    %20 = vector.shape_cast %19 : vector<1x128x128xf32> to vector<128x128xf32>
    %cst_19 = arith.constant dense<0.000000e+00> : vector<8x128xf32>
    %21 = tpu.matmul %18, %20, %cst_19 {dimension_numbers = #tpu.dot_dimension_numbers<[1], [0], [0], [1], [0, 0, 1, 1], [], []>} : vector<8x128xf32>, vector<128x128xf32>, vector<8x128xf32> -> vector<8x128xf32>
    %22 = arith.addf %17, %21 : vector<8x128xf32>
    %cst_20 = arith.constant 0.000000e+00 : f32
    %23 = vector.broadcast %cst_20 : f32 to vector<8x128xf32>
    %24 = arith.maximumf %22, %23 : vector<8x128xf32>
    %c8_21 = arith.constant 8 : index
    %c0_22 = arith.constant 0 : index
    %25 = vector.load %arg7[%c8_21, %c0_22] : memref<17x128xf32, #tpu.memory_space<vmem>>, vector<8x128xf32>
    tpu.vector_store %arg7[%c8_21, %c0_22], %24 {strides = array<i32>} : memref<17x128xf32, #tpu.memory_space<vmem>>, vector<8x128xf32>,
    %c0_23 = arith.constant 0 : index
    %c0_24 = arith.constant 0 : index
    %26 = vector.load %arg5[%c0_23, %c0_24] : memref<1x128xf32, #tpu.memory_space<vmem>>, vector<1x128xf32>
    %27 = vector.shape_cast %26 : vector<1x128xf32> to vector<1x128xf32>
    %28 = vector.broadcast %27 : vector<1x128xf32> to vector<8x128xf32>
    %c1_25 = arith.constant 1 : index
    %c0_26 = arith.constant 0 : index
    %c0_27 = arith.constant 0 : index
    %29 = vector.load %arg4[%c1_25, %c0_26, %c0_27] : memref<3x128x128xf32, #tpu.memory_space<vmem>>, vector<1x128x128xf32>
    %30 = vector.shape_cast %29 : vector<1x128x128xf32> to vector<128x128xf32>
    %cst_28 = arith.constant dense<0.000000e+00> : vector<8x128xf32>
    %31 = tpu.matmul %24, %30, %cst_28 {dimension_numbers = #tpu.dot_dimension_numbers<[1], [0], [0], [1], [0, 0, 1, 1], [], []>} : vector<8x128xf32>, vector<128x128xf32>, vector<8x128xf32> -> vector<8x128xf32>
    %32 = arith.addf %28, %31 : vector<8x128xf32>
    %c7_29 = arith.constant 7 : index
    %c0_30 = arith.constant 0 : index
    %33 = vector.load %arg7[%c7_29, %c0_30] : memref<17x128xf32, #tpu.memory_space<vmem>>, vector<8x128xf32>
    %c0_31 = arith.constant 0 : index
    %c0_32 = arith.constant 0 : index
    %c0_33 = arith.constant 0 : index
    %34 = vector.load %arg4[%c0_31, %c0_32, %c0_33] : memref<3x128x128xf32, #tpu.memory_space<vmem>>, vector<1x128x128xf32>
    %35 = vector.shape_cast %34 : vector<1x128x128xf32> to vector<128x128xf32>
    %cst_34 = arith.constant dense<0.000000e+00> : vector<8x128xf32>
    %36 = tpu.matmul %33, %35, %cst_34 {dimension_numbers = #tpu.dot_dimension_numbers<[1], [0], [0], [1], [0, 0, 1, 1], [], []>} : vector<8x128xf32>, vector<128x128xf32>, vector<8x128xf32> -> vector<8x128xf32>
    %37 = arith.addf %32, %36 : vector<8x128xf32>
    %c9_35 = arith.constant 9 : index
    %c0_36 = arith.constant 0 : index
    %38 = vector.load %arg7[%c9_35, %c0_36] : memref<17x128xf32, #tpu.memory_space<vmem>>, vector<8x128xf32>
    %c2_37 = arith.constant 2 : index
    %c0_38 = arith.constant 0 : index
    %c0_39 = arith.constant 0 : index
    %39 = vector.load %arg4[%c2_37, %c0_38, %c0_39] : memref<3x128x128xf32, #tpu.memory_space<vmem>>, vector<1x128x128xf32>
    %40 = vector.shape_cast %39 : vector<1x128x128xf32> to vector<128x128xf32>
    %cst_40 = arith.constant dense<0.000000e+00> : vector<8x128xf32>
    %41 = tpu.matmul %38, %40, %cst_40 {dimension_numbers = #tpu.dot_dimension_numbers<[1], [0], [0], [1], [0, 0, 1, 1], [], []>} : vector<8x128xf32>, vector<128x128xf32>, vector<8x128xf32> -> vector<8x128xf32>
    %42 = arith.addf %37, %41 : vector<8x128xf32>
    %43 = arith.addf %4, %42 : vector<8x128xf32>
    %cst_41 = arith.constant 0.000000e+00 : f32
    %44 = vector.broadcast %cst_41 : f32 to vector<8x128xf32>
    %45 = arith.maximumf %43, %44 : vector<8x128xf32>
    %c0_42 = arith.constant 0 : index
    %c0_43 = arith.constant 0 : index
    %c0_44 = arith.constant 0 : index
    %46 = vector.load %arg6[%c0_42, %c0_43, %c0_44] : memref<1x8x128xf32, #tpu.memory_space<vmem>>, vector<1x8x128xf32>
    %47 = vector.shape_cast %46 : vector<1x8x128xf32> to vector<8x128xf32>
    %48 = vector.shape_cast %45 : vector<8x128xf32> to vector<1x8x128xf32>
    tpu.vector_store %arg6[%c0_42, %c0_43, %c0_44], %48 {strides = array<i32>} : memref<1x8x128xf32, #tpu.memory_space<vmem>>, vector<1x8x128xf32>,
    return
  }
  func.func @transform_0(%arg0: i32) -> (i32, i32, i32) {
    %c0_i32 = arith.constant 0 : i32
    %c0_i32_0 = arith.constant 0 : i32
    %c0_i32_1 = arith.constant 0 : i32
    return %arg0, %c0_i32, %c0_i32_0 : i32, i32, i32
  }
  func.func @transform_1(%arg0: i32) -> (i32, i32, i32) {
    %c0_i32 = arith.constant 0 : i32
    %c0_i32_0 = arith.constant 0 : i32
    %c0_i32_1 = arith.constant 0 : i32
    %c0_i32_2 = arith.constant 0 : i32
    return %c0_i32, %c0_i32_0, %c0_i32_1 : i32, i32, i32
  }
  func.func @transform_2(%arg0: i32) -> (i32, i32) {
    %c0_i32 = arith.constant 0 : i32
    %c0_i32_0 = arith.constant 0 : i32
    %c0_i32_1 = arith.constant 0 : i32
    return %c0_i32, %c0_i32_0 : i32, i32
  }
  func.func @transform_3(%arg0: i32) -> (i32, i32, i32) {
    %c0_i32 = arith.constant 0 : i32
    %c0_i32_0 = arith.constant 0 : i32
    %c0_i32_1 = arith.constant 0 : i32
    %c0_i32_2 = arith.constant 0 : i32
    return %c0_i32, %c0_i32_0, %c0_i32_1 : i32, i32, i32
  }
  func.func @transform_4(%arg0: i32) -> (i32, i32) {
    %c0_i32 = arith.constant 0 : i32
    %c0_i32_0 = arith.constant 0 : i32
    %c0_i32_1 = arith.constant 0 : i32
    return %c0_i32, %c0_i32_0 : i32, i32
  }
  func.func @transform_5(%arg0: i32) -> (i32, i32, i32) {
    %c0_i32 = arith.constant 0 : i32
    %c0_i32_0 = arith.constant 0 : i32
    %c0_i32_1 = arith.constant 0 : i32
    return %arg0, %c0_i32, %c0_i32_0 : i32, i32, i32
  }
}

</mosaic_0001>

<llo_original>
// kernel: tpu_custom_call.1
$region0: #{tpu_custom_call.1}
  #allocation0 [shape = 'u32[]', space=smem, size = 0x4, offset = 0x4, fixed_abs, tag = 'smem constant byte address 0x4 - core index']
  #allocation1 [shape = 'u32[72,128]{1,0:T(1,128)}', space=vmem, size = 0x9000, scoped, tag = 'internal scratch']
  #allocation2 [shape = 'f32[17,128]{1,0:T(8,128)}', space=vmem, size = 0x3000, scoped, tag = 'scratch operand']
  %s0 = inlined_call_operand.hbm [shape: f32[2,8,128], index: 0, kind: input, shape index: {}]
  %s1 = inlined_call_operand.hbm [shape: f32[3,128,128], index: 1, kind: input, shape index: {}]
  %s2 = inlined_call_operand.vmem [shape: f32[1,128], index: 2, kind: input, shape index: {}]
  %s3 = inlined_call_operand.hbm [shape: f32[3,128,128], index: 3, kind: input, shape index: {}]
  %s4 = inlined_call_operand.vmem [shape: f32[1,128], index: 4, kind: input, shape index: {}]
  %s5 = inlined_call_operand.hbm [shape: f32[2,8,128], index: 5, kind: output, shape index: {}]
  %s6 = sld [smem:[#allocation0]]
  $region65: #{tpu_custom_call.1} parent=0
    _
  %s8 = ssub.s32 1, %s6
  %s9 = scalar_select 0, %s8, %s6
  $region1: #{tpu_custom_call.1} parent=0
    #allocation3 [shape = 'u8[8192]{0}', space=vmem, size = 0x2000, scoped, tag = 'input window, operand 0']
    #allocation4 [shape = 's32[2]{0}', space=sflag, size = 0x8, scoped, tag = 'scoped memory for tpu_custom_call.1']
    #allocation5 [shape = 's32[2]{0}', space=sflag, size = 0x8, scoped, tag = 'scoped memory for tpu_custom_call.1']
    #allocation6 [shape = 'u8[196608]{0}', space=vmem, size = 0x30000, scoped, tag = 'input window, operand 1, single buffered']
    #allocation7 [shape = 's32[1]{0}', space=sflag, size = 0x4, scoped, tag = 'scoped memory for tpu_custom_call.1']
    #allocation8 [shape = 'u8[196608]{0}', space=vmem, size = 0x30000, scoped, tag = 'input window, operand 3, single buffered']
    #allocation9 [shape = 'u8[8192]{0}', space=vmem, size = 0x2000, scoped, tag = 'output window, operand 0']
    %10 = vsyncpa [#allocation4], 0
    %s11 = scalar_lea.sflag [#allocation4], 1
    %12 = vsyncpa %s11, 0
    %13 = vsyncpa [#allocation7], 0
    %14 = vsyncpa [#allocation5], 0
    %s15 = scalar_lea.sflag [#allocation5], 1
    %16 = vsyncpa %s15, 0
    loop: start=0, step=1, limit=4
    $region2: #{tpu_custom_call.1} parent=1 // loop_pre_header
      _
    $region3: #{tpu_custom_call.1} parent=1 // loop_header
      %s18 = sphi 0, %s22
      %p19 = scmp.ge.s32.totalorder %s18, 4
      %s28 = sphi 0, %s30
      %s31 = sphi 0, %s28
      %s32 = sphi 0, %s31
      %s48 = sphi 0, %s32
      %s52 = sphi 0, %s52
      %s54 = sphi 0, %s52
      %s55 = sphi 0, %s54
      %s69 = sphi 0, %s55
      %s73 = sphi 0, %s73
      %s75 = sphi 0, %s73
      %s76 = sphi 0, %s75
      %s90 = sphi 0, %s76
      %s94 = sphi 0, %s94
      %s96 = sphi 0, %s94
      %s97 = sphi 0, %s96
      %s111 = sphi 0, %s97
      %s115 = sphi 0, %s115
      %s117 = sphi 0, %s115
      %s118 = sphi 0, %s117
      %s132 = sphi 0, %s118
      %s138 = sphi 0, %s140
      %s141 = sphi 0, %s138
      %s142 = sphi 0, %s141
      %s158 = sphi 0, %s142
    $region4: #{tpu_custom_call.1} parent=1 // loop_header_branch
      %21 = sbr.rel (%p19) target = $region8
    $region5: #{tpu_custom_call.1} parent=1 // loop_body
      %s23 = ssub.s32 %s18, 1
      %s24 = ssub.s32 %s18, 2
      %s25 = sadd.s32 %s18, 1
      %s26 = ssub.s32 %s18, %s25
      %p27 = scmp.eq.s32.totalorder %s26, 0
      %s29 = sadd.s32 %s28, 1
      %s30 = scalar_select %p27, %s28, %s29
      %p33 = pneg %p27
      %p34 = scmp.eq.s32.totalorder %s18, 1
      %p35 = por %p33, %p34
      %p36 = scmp.ne.s32.totalorder %s28, %s31
      %p37 = scmp.eq.s32.totalorder %s18, 0
      %p38 = por %p36, %p37
      %p39 = scmp.ne.s32.totalorder %s28, %s31
      %p40 = scmp.eq.s32.totalorder %s23, 1
      %p41 = por %p39, %p40
      %p42 = scmp.ne.s32.totalorder %s31, %s32
      %p43 = scmp.eq.s32.totalorder %s23, 0
      %p44 = por %p42, %p43
      %p45 = scmp.ne.s32.totalorder %s31, %s32
      %p46 = scmp.eq.s32.totalorder %s24, 1
      %p47 = por %p45, %p46
      %p49 = scmp.ne.s32.totalorder %s32, %s48
      %p50 = scmp.eq.s32.totalorder %s24, 0
      %p51 = por %p49, %p50
      %s53 = sadd.s32 %s52, 1
      %p56 = scmp.eq.s32.totalorder %s18, 1
      %p57 = scmp.ne.s32.totalorder %s52, %s54
      %p58 = scmp.eq.s32.totalorder %s18, 0
      %p59 = por %p57, %p58
      %p60 = scmp.ne.s32.totalorder %s52, %s54
      %p61 = scmp.eq.s32.totalorder %s23, 1
      %p62 = por %p60, %p61
      %p63 = scmp.ne.s32.totalorder %s54, %s55
      %p64 = scmp.eq.s32.totalorder %s23, 0
      %p65 = por %p63, %p64
      %p66 = scmp.ne.s32.totalorder %s54, %s55
      %p67 = scmp.eq.s32.totalorder %s24, 1
      %p68 = por %p66, %p67
      %p70 = scmp.ne.s32.totalorder %s55, %s69
      %p71 = scmp.eq.s32.totalorder %s24, 0
      %p72 = por %p70, %p71
      %s74 = sadd.s32 %s73, 1
      %p77 = scmp.eq.s32.totalorder %s18, 1
      %p78 = scmp.ne.s32.totalorder %s73, %s75
      %p79 = scmp.eq.s32.totalorder %s18, 0
      %p80 = por %p78, %p79
      %p81 = scmp.ne.s32.totalorder %s73, %s75
      %p82 = scmp.eq.s32.totalorder %s23, 1
      %p83 = por %p81, %p82
      %p84 = scmp.ne.s32.totalorder %s75, %s76
      %p85 = scmp.eq.s32.totalorder %s23, 0
      %p86 = por %p84, %p85
      %p87 = scmp.ne.s32.totalorder %s75, %s76
      %p88 = scmp.eq.s32.totalorder %s24, 1
      %p89 = por %p87, %p88
      %p91 = scmp.ne.s32.totalorder %s76, %s90
      %p92 = scmp.eq.s32.totalorder %s24, 0
      %p93 = por %p91, %p92
      %s95 = sadd.s32 %s94, 1
      %p98 = scmp.eq.s32.totalorder %s18, 1
      %p99 = scmp.ne.s32.totalorder %s94, %s96
      %p100 = scmp.eq.s32.totalorder %s18, 0
      %p101 = por %p99, %p100
      %p102 = scmp.ne.s32.totalorder %s94, %s96
      %p103 = scmp.eq.s32.totalorder %s23, 1
      %p104 = por %p102, %p103
      %p105 = scmp.ne.s32.totalorder %s96, %s97
      %p106 = scmp.eq.s32.totalorder %s23, 0
      %p107 = por %p105, %p106
      %p108 = scmp.ne.s32.totalorder %s96, %s97
      %p109 = scmp.eq.s32.totalorder %s24, 1
      %p110 = por %p108, %p109
      %p112 = scmp.ne.s32.totalorder %s97, %s111
      %p113 = scmp.eq.s32.totalorder %s24, 0
      %p114 = por %p112, %p113
      %s116 = sadd.s32 %s115, 1
      %p119 = scmp.eq.s32.totalorder %s18, 1
      %p120 = scmp.ne.s32.totalorder %s115, %s117
      %p121 = scmp.eq.s32.totalorder %s18, 0
      %p122 = por %p120, %p121
      %p123 = scmp.ne.s32.totalorder %s115, %s117
      %p124 = scmp.eq.s32.totalorder %s23, 1
      %p125 = por %p123, %p124
      %p126 = scmp.ne.s32.totalorder %s117, %s118
      %p127 = scmp.eq.s32.totalorder %s23, 0
      %p128 = por %p126, %p127
      %p129 = scmp.ne.s32.totalorder %s117, %s118
      %p130 = scmp.eq.s32.totalorder %s24, 1
      %p131 = por %p129, %p130
      %p133 = scmp.ne.s32.totalorder %s118, %s132
      %p134 = scmp.eq.s32.totalorder %s24, 0
      %p135 = por %p133, %p134
      %s136 = ssub.s32 %s18, %s25
      %p137 = scmp.eq.s32.totalorder %s136, 0
      %s139 = sadd.s32 %s138, 1
      %s140 = scalar_select %p137, %s138, %s139
      %p143 = pneg %p137
      %p144 = scmp.eq.s32.totalorder %s18, 1
      %p145 = por %p143, %p144
      %p146 = scmp.ne.s32.totalorder %s138, %s141
      %p147 = scmp.eq.s32.totalorder %s18, 0
      %p148 = por %p146, %p147
      %p149 = scmp.ne.s32.totalorder %s138, %s141
      %p150 = scmp.eq.s32.totalorder %s23, 1
      %p151 = por %p149, %p150
      %p152 = scmp.ne.s32.totalorder %s141, %s142
      %p153 = scmp.eq.s32.totalorder %s23, 0
      %p154 = por %p152, %p153
      %p155 = scmp.ne.s32.totalorder %s141, %s142
      %p156 = scmp.eq.s32.totalorder %s24, 1
      %p157 = por %p155, %p156
      %p159 = scmp.ne.s32.totalorder %s142, %s158
      %p160 = scmp.eq.s32.totalorder %s24, 0
      %p161 = por %p159, %p160
      %p162 = scmp.le.s32.totalorder 1, %s18
      %p163 = scmp.lt.s32.totalorder %s18, 3
      %p164 = pnand %p162, %p163
      %p165 = pneg %p164
      // Predicated region
      $region9: #{tpu_custom_call.1} parent=5 // pred_check
        _
      $region10: #{tpu_custom_call.1} parent=5 // pred_check_branch
        %167 = sbr.rel (%p164) target = $region12
      $region11: #{tpu_custom_call.1} parent=5 // pred_region
        %s168 = ssub.s32 %s18, 1
        // Predicated region
        $region13: #{tpu_custom_call.1} parent=11 // pred_check
          %p169 = pneg %p65
        $region14: #{tpu_custom_call.1} parent=11 // pred_check_branch
          %171 = sbr.rel (%p169) target = $region16
        $region15: #{tpu_custom_call.1} parent=11 // pred_region
          %173 = vsyncadd [#allocation7], 0
          %s174 = sshll.u32 %s1, 4
          %s175 = int_to_ptr.hbm [resolvable:$true] %s174
          %s176 = sshll.u32 [#allocation6], 4
          %s177 = int_to_ptr.vmem [resolvable:$true] %s176
          %182 = dma.hbm_to_vmem [thread:$0]  %s175, 6144, %s177, [#allocation7], 128, 128, 8
        $region16: #{tpu_custom_call.1} parent=11 // pred_fallthru
          _
        // Predicated region
        $region17: #{tpu_custom_call.1} parent=11 // pred_check
          %p183 = pneg %p86
        $region18: #{tpu_custom_call.1} parent=11 // pred_check_branch
          %185 = sbr.rel (%p183) target = $region20
        $region19: #{tpu_custom_call.1} parent=11 // pred_region
          _
        $region20: #{tpu_custom_call.1} parent=11 // pred_fallthru
          _
        // Predicated region
        $region21: #{tpu_custom_call.1} parent=11 // pred_check
          %p186 = pneg %p107
        $region22: #{tpu_custom_call.1} parent=11 // pred_check_branch
          %188 = sbr.rel (%p186) target = $region24
        $region23: #{tpu_custom_call.1} parent=11 // pred_region
          %190 = vsyncadd [#allocation7], 0
          %s191 = sshll.u32 %s3, 4
          %s192 = int_to_ptr.hbm [resolvable:$true] %s191
          %s193 = sshll.u32 [#allocation8], 4
          %s194 = int_to_ptr.vmem [resolvable:$true] %s193
          %199 = dma.hbm_to_vmem [thread:$0]  %s192, 6144, %s194, [#allocation7], 128, 128, 8
        $region24: #{tpu_custom_call.1} parent=11 // pred_fallthru
          _
        // Predicated region
        $region25: #{tpu_custom_call.1} parent=11 // pred_check
          %p200 = pneg %p128
        $region26: #{tpu_custom_call.1} parent=11 // pred_check_branch
          %202 = sbr.rel (%p200) target = $region28
        $region27: #{tpu_custom_call.1} parent=11 // pred_region
          _
        $region28: #{tpu_custom_call.1} parent=11 // pred_fallthru
          _
      $region12: #{tpu_custom_call.1} parent=5 // pred_fallthru
        _
      %p203 = scmp.lt.s32.totalorder %s18, 2
      // Predicated region
      $region29: #{tpu_custom_call.1} parent=5 // pred_check
        %p204 = pneg %p203
      $region30: #{tpu_custom_call.1} parent=5 // pred_check_branch
        %206 = sbr.rel (%p204) target = $region32
      $region31: #{tpu_custom_call.1} parent=5 // pred_region
        // Predicated region
        $region33: #{tpu_custom_call.1} parent=31 // pred_check
          %p207 = pneg %p38
        $region34: #{tpu_custom_call.1} parent=31 // pred_check_branch
          %209 = sbr.rel (%p207) target = $region36
        $region35: #{tpu_custom_call.1} parent=31 // pred_region
          %s210 = sand.u32 %s28, 1
          %s211 = scalar_lea.sflag [#allocation4], %s210
          %s212 = sand.u32 %s28, 1
          %s213 = smul.addr %s212, 8
          %s214 = scalar_lea.vmem [#allocation3], %s213
          %216 = vsyncadd %s211, 0
          %s217 = smul.addr %s18, 8
          %s218 = scalar_lea.hbm %s0, %s217
          %s220 = sshll.u32 %s218, 4
          %s221 = int_to_ptr.hbm [resolvable:$true] %s220
          %s222 = sshll.u32 %s214, 4
          %s223 = int_to_ptr.vmem [resolvable:$true] %s222
          %225 = dma.hbm_to_vmem [thread:$0]  %s221, 128, %s223, %s211
        $region36: #{tpu_custom_call.1} parent=31 // pred_fallthru
          _
      $region32: #{tpu_custom_call.1} parent=5 // pred_fallthru
        _
      %p226 = scmp.le.s32.totalorder 1, %s18
      %p227 = scmp.lt.s32.totalorder %s18, 3
      %p228 = pnand %p226, %p227
      %p229 = pneg %p228
      // Predicated region
      $region37: #{tpu_custom_call.1} parent=5 // pred_check
        _
      $region38: #{tpu_custom_call.1} parent=5 // pred_check_branch
        %231 = sbr.rel (%p228) target = $region40
      $region39: #{tpu_custom_call.1} parent=5 // pred_region
        %s232 = ssub.s32 %s18, 1
        %s233 = sand.u32 %s31, 1
        %s234 = scalar_lea.sflag [#allocation4], %s233
        %s235 = sand.u32 %s31, 1
        %s236 = smul.addr %s235, 8
        %s237 = scalar_lea.vmem [#allocation3], %s236
        // Predicated region
        $region41: #{tpu_custom_call.1} parent=39 // pred_check
          %p238 = pneg %p44
        $region42: #{tpu_custom_call.1} parent=39 // pred_check_branch
          %240 = sbr.rel (%p238) target = $region44
        $region43: #{tpu_custom_call.1} parent=39 // pred_region
          %242 = dma.done %s234, 128
        $region44: #{tpu_custom_call.1} parent=39 // pred_fallthru
          _
        // Predicated region
        $region45: #{tpu_custom_call.1} parent=39 // pred_check
          %p243 = pneg %p65
        $region46: #{tpu_custom_call.1} parent=39 // pred_check_branch
          %245 = sbr.rel (%p243) target = $region48
        $region47: #{tpu_custom_call.1} parent=39 // pred_region
          %247 = dma.done [#allocation7], 6144
        $region48: #{tpu_custom_call.1} parent=39 // pred_fallthru
          _
        // Predicated region
        $region49: #{tpu_custom_call.1} parent=39 // pred_check
          %p248 = pneg %p107
        $region50: #{tpu_custom_call.1} parent=39 // pred_check_branch
          %250 = sbr.rel (%p248) target = $region52
        $region51: #{tpu_custom_call.1} parent=39 // pred_region
          %252 = dma.done [#allocation7], 6144
        $region52: #{tpu_custom_call.1} parent=39 // pred_fallthru
          _
        %s253 = sand.u32 %s31, 1
        %s254 = scalar_lea.sflag [#allocation4], %s253
        %s255 = sand.u32 %s31, 1
        %s256 = smul.addr %s255, 8
        %s257 = scalar_lea.vmem [#allocation3], %s256
        %p258 = pneg %p44
        %p259 = pneg %p41
        %p260 = pneg %p65
        %p261 = pneg %p62
        %p262 = pneg %p86
        %p263 = pneg %p83
        %p264 = pneg %p107
        %p265 = pneg %p104
        %p266 = pneg %p128
        %p267 = pneg %p125
        %p268 = pneg %p154
        %p269 = pneg %p151
        %s270 = sand.u32 %s141, 1
        %s271 = scalar_lea.sflag [#allocation5], %s270
        %s272 = sand.u32 %s141, 1
        %s273 = smul.addr %s272, 8
        %s274 = scalar_lea.vmem [#allocation9], %s273
        %275 = vst [vmem:[#allocation2 + $0x7] sm:$0x1] 0.0
        %276 = vst [vmem:[#allocation2 + $0x10] sm:$0x1] 0.0
        %v277 = vld [vmem:[%s237] sm:$0xff]
        %278 = vst [vmem:[#allocation2 + $0x8] sm:$0xff] %v277
        %v279 = vld [vmem:[%s2] sm:$0x1]
        %v281 = vperm.slane %v279, 0
        %s283 = scalar_lea.vmem [#allocation6], 128
        %v284 = vld [vmem:[%s283] sm:$0xff]
        %v285 = vld [vmem:[%s283 + $0x8] sm:$0xff]
        %v286 = vld [vmem:[%s283 + $0x10] sm:$0xff]
        %v287 = vld [vmem:[%s283 + $0x18] sm:$0xff]
        %v288 = vld [vmem:[%s283 + $0x20] sm:$0xff]
        %v289 = vld [vmem:[%s283 + $0x28] sm:$0xff]
        %v290 = vld [vmem:[%s283 + $0x30] sm:$0xff]
        %v291 = vld [vmem:[%s283 + $0x38] sm:$0xff]
        %v292 = vld [vmem:[%s283 + $0x40] sm:$0xff]
        %v293 = vld [vmem:[%s283 + $0x48] sm:$0xff]
        %v294 = vld [vmem:[%s283 + $0x50] sm:$0xff]
        %v295 = vld [vmem:[%s283 + $0x58] sm:$0xff]
        %v296 = vld [vmem:[%s283 + $0x60] sm:$0xff]
        %v297 = vld [vmem:[%s283 + $0x68] sm:$0xff]
        %v298 = vld [vmem:[%s283 + $0x70] sm:$0xff]
        %v299 = vld [vmem:[%s283 + $0x78] sm:$0xff]
        %300 = vmatpush.msra.mxu0 %v299
        %301 = vmatpush.msra.mxu0 %v298
        %302 = vmatpush.msra.mxu0 %v297
        %303 = vmatpush.msra.mxu0 %v296
        %304 = vmatpush.msra.mxu0 %v295
        %305 = vmatpush.msra.mxu0 %v294
        %306 = vmatpush.msra.mxu0 %v293
        %307 = vmatpush.msra.mxu0 %v292
        %308 = vmatpush.msra.mxu0 %v291
        %309 = vmatpush.msra.mxu0 %v290
        %310 = vmatpush.msra.mxu0 %v289
        %311 = vmatpush.msra.mxu0 %v288
        %312 = vmatpush.msra.mxu0 %v287
        %313 = vmatpush.msra.mxu0 %v286
        %314 = vmatpush.msra.mxu0 %v285
        %315 = vmatpush.msra.mxu0 %v284
        %316 = vmatmul.f32.gmra.mxu0 %v277
        %v317 = vpop.f32.mrf.mxu0
        %v318 = vadd.f32 0.0, %v317
        %319 = vdwg.mxu0
        %v320 = vadd.f32 %v281, %v318
        %v321 = vld [vmem:[#allocation2 + $0x7] sm:$0xff]
        %v322 = vld [vmem:[#allocation6] sm:$0xff]
        %v323 = vld [vmem:[#allocation6 + $0x8] sm:$0xff]
        %v324 = vld [vmem:[#allocation6 + $0x10] sm:$0xff]
        %v325 = vld [vmem:[#allocation6 + $0x18] sm:$0xff]
        %v326 = vld [vmem:[#allocation6 + $0x20] sm:$0xff]
        %v327 = vld [vmem:[#allocation6 + $0x28] sm:$0xff]
        %v328 = vld [vmem:[#allocation6 + $0x30] sm:$0xff]
        %v329 = vld [vmem:[#allocation6 + $0x38] sm:$0xff]
        %v330 = vld [vmem:[#allocation6 + $0x40] sm:$0xff]
        %v331 = vld [vmem:[#allocation6 + $0x48] sm:$0xff]
        %v332 = vld [vmem:[#allocation6 + $0x50] sm:$0xff]
        %v333 = vld [vmem:[#allocation6 + $0x58] sm:$0xff]
        %v334 = vld [vmem:[#allocation6 + $0x60] sm:$0xff]
        %v335 = vld [vmem:[#allocation6 + $0x68] sm:$0xff]
        %v336 = vld [vmem:[#allocation6 + $0x70] sm:$0xff]
        %v337 = vld [vmem:[#allocation6 + $0x78] sm:$0xff]
        %338 = vmatpush.msra.mxu0 %v337
        %339 = vmatpush.msra.mxu0 %v336
        %340 = vmatpush.msra.mxu0 %v335
        %341 = vmatpush.msra.mxu0 %v334
        %342 = vmatpush.msra.mxu0 %v333
        %343 = vmatpush.msra.mxu0 %v332
        %344 = vmatpush.msra.mxu0 %v331
        %345 = vmatpush.msra.mxu0 %v330
        %346 = vmatpush.msra.mxu0 %v329
        %347 = vmatpush.msra.mxu0 %v328
        %348 = vmatpush.msra.mxu0 %v327
        %349 = vmatpush.msra.mxu0 %v326
        %350 = vmatpush.msra.mxu0 %v325
        %351 = vmatpush.msra.mxu0 %v324
        %352 = vmatpush.msra.mxu0 %v323
        %353 = vmatpush.msra.mxu0 %v322
        %354 = vmatmul.f32.gmra.mxu0 %v321
        %v355 = vpop.f32.mrf.mxu0
        %v356 = vadd.f32 0.0, %v355
        %357 = vdwg.mxu0
        %v358 = vadd.f32 %v320, %v356
        %v359 = vld [vmem:[#allocation2 + $0x9] sm:$0xff]
        %s360 = scalar_lea.vmem [#allocation6], 256
        %v361 = vld [vmem:[%s360] sm:$0xff]
        %v362 = vld [vmem:[%s360 + $0x8] sm:$0xff]
        %v363 = vld [vmem:[%s360 + $0x10] sm:$0xff]
        %v364 = vld [vmem:[%s360 + $0x18] sm:$0xff]
        %v365 = vld [vmem:[%s360 + $0x20] sm:$0xff]
        %v366 = vld [vmem:[%s360 + $0x28] sm:$0xff]
        %v367 = vld [vmem:[%s360 + $0x30] sm:$0xff]
        %v368 = vld [vmem:[%s360 + $0x38] sm:$0xff]
        %v369 = vld [vmem:[%s360 + $0x40] sm:$0xff]
        %v370 = vld [vmem:[%s360 + $0x48] sm:$0xff]
        %v371 = vld [vmem:[%s360 + $0x50] sm:$0xff]
        %v372 = vld [vmem:[%s360 + $0x58] sm:$0xff]
        %v373 = vld [vmem:[%s360 + $0x60] sm:$0xff]
        %v374 = vld [vmem:[%s360 + $0x68] sm:$0xff]
        %v375 = vld [vmem:[%s360 + $0x70] sm:$0xff]
        %v376 = vld [vmem:[%s360 + $0x78] sm:$0xff]
        %377 = vmatpush.msra.mxu0 %v376
        %378 = vmatpush.msra.mxu0 %v375
        %379 = vmatpush.msra.mxu0 %v374
        %380 = vmatpush.msra.mxu0 %v373
        %381 = vmatpush.msra.mxu0 %v372
        %382 = vmatpush.msra.mxu0 %v371
        %383 = vmatpush.msra.mxu0 %v370
        %384 = vmatpush.msra.mxu0 %v369
        %385 = vmatpush.msra.mxu0 %v368
        %386 = vmatpush.msra.mxu0 %v367
        %387 = vmatpush.msra.mxu0 %v366
        %388 = vmatpush.msra.mxu0 %v365
        %389 = vmatpush.msra.mxu0 %v364
        %390 = vmatpush.msra.mxu0 %v363
        %391 = vmatpush.msra.mxu0 %v362
        %392 = vmatpush.msra.mxu0 %v361
        %393 = vmatmul.f32.gmra.mxu0 %v359
        %v394 = vpop.f32.mrf.mxu0
        %v395 = vadd.f32 0.0, %v394
        %396 = vdwg.mxu0
        %v397 = vadd.f32 %v358, %v395
        %v398 = vmax.f32 %v397, 0.0
        %399 = vst [vmem:[#allocation2 + $0x8] sm:$0xff] %v398
        %v400 = vld [vmem:[%s4] sm:$0x1]
        %v402 = vperm.slane %v400, 0
        %s404 = scalar_lea.vmem [#allocation8], 128
        %v405 = vld [vmem:[%s404] sm:$0xff]
        %v406 = vld [vmem:[%s404 + $0x8] sm:$0xff]
        %v407 = vld [vmem:[%s404 + $0x10] sm:$0xff]
        %v408 = vld [vmem:[%s404 + $0x18] sm:$0xff]
        %v409 = vld [vmem:[%s404 + $0x20] sm:$0xff]
        %v410 = vld [vmem:[%s404 + $0x28] sm:$0xff]
        %v411 = vld [vmem:[%s404 + $0x30] sm:$0xff]
        %v412 = vld [vmem:[%s404 + $0x38] sm:$0xff]
        %v413 = vld [vmem:[%s404 + $0x40] sm:$0xff]
        %v414 = vld [vmem:[%s404 + $0x48] sm:$0xff]
        %v415 = vld [vmem:[%s404 + $0x50] sm:$0xff]
        %v416 = vld [vmem:[%s404 + $0x58] sm:$0xff]
        %v417 = vld [vmem:[%s404 + $0x60] sm:$0xff]
        %v418 = vld [vmem:[%s404 + $0x68] sm:$0xff]
        %v419 = vld [vmem:[%s404 + $0x70] sm:$0xff]
        %v420 = vld [vmem:[%s404 + $0x78] sm:$0xff]
        %421 = vmatpush.msra.mxu0 %v420
        %422 = vmatpush.msra.mxu0 %v419
        %423 = vmatpush.msra.mxu0 %v418
        %424 = vmatpush.msra.mxu0 %v417
        %425 = vmatpush.msra.mxu0 %v416
        %426 = vmatpush.msra.mxu0 %v415
        %427 = vmatpush.msra.mxu0 %v414
        %428 = vmatpush.msra.mxu0 %v413
        %429 = vmatpush.msra.mxu0 %v412
        %430 = vmatpush.msra.mxu0 %v411
        %431 = vmatpush.msra.mxu0 %v410
        %432 = vmatpush.msra.mxu0 %v409
        %433 = vmatpush.msra.mxu0 %v408
        %434 = vmatpush.msra.mxu0 %v407
        %435 = vmatpush.msra.mxu0 %v406
        %436 = vmatpush.msra.mxu0 %v405
        %437 = vmatmul.f32.gmra.mxu0 %v398
        %v438 = vpop.f32.mrf.mxu0
        %v439 = vadd.f32 0.0, %v438
        %440 = vdwg.mxu0
        %v441 = vadd.f32 %v402, %v439
        %v442 = vld [vmem:[#allocation2 + $0x7] sm:$0xff]
        %v443 = vld [vmem:[#allocation8] sm:$0xff]
        %v444 = vld [vmem:[#allocation8 + $0x8] sm:$0xff]
        %v445 = vld [vmem:[#allocation8 + $0x10] sm:$0xff]
        %v446 = vld [vmem:[#allocation8 + $0x18] sm:$0xff]
        %v447 = vld [vmem:[#allocation8 + $0x20] sm:$0xff]
        %v448 = vld [vmem:[#allocation8 + $0x28] sm:$0xff]
        %v449 = vld [vmem:[#allocation8 + $0x30] sm:$0xff]
        %v450 = vld [vmem:[#allocation8 + $0x38] sm:$0xff]
        %v451 = vld [vmem:[#allocation8 + $0x40] sm:$0xff]
        %v452 = vld [vmem:[#allocation8 + $0x48] sm:$0xff]
        %v453 = vld [vmem:[#allocation8 + $0x50] sm:$0xff]
        %v454 = vld [vmem:[#allocation8 + $0x58] sm:$0xff]
        %v455 = vld [vmem:[#allocation8 + $0x60] sm:$0xff]
        %v456 = vld [vmem:[#allocation8 + $0x68] sm:$0xff]
        %v457 = vld [vmem:[#allocation8 + $0x70] sm:$0xff]
        %v458 = vld [vmem:[#allocation8 + $0x78] sm:$0xff]
        %459 = vmatpush.msra.mxu0 %v458
        %460 = vmatpush.msra.mxu0 %v457
        %461 = vmatpush.msra.mxu0 %v456
        %462 = vmatpush.msra.mxu0 %v455
        %463 = vmatpush.msra.mxu0 %v454
        %464 = vmatpush.msra.mxu0 %v453
        %465 = vmatpush.msra.mxu0 %v452
        %466 = vmatpush.msra.mxu0 %v451
        %467 = vmatpush.msra.mxu0 %v450
        %468 = vmatpush.msra.mxu0 %v449
        %469 = vmatpush.msra.mxu0 %v448
        %470 = vmatpush.msra.mxu0 %v447
        %471 = vmatpush.msra.mxu0 %v446
        %472 = vmatpush.msra.mxu0 %v445
        %473 = vmatpush.msra.mxu0 %v444
        %474 = vmatpush.msra.mxu0 %v443
        %475 = vmatmul.f32.gmra.mxu0 %v442
        %v476 = vpop.f32.mrf.mxu0
        %v477 = vadd.f32 0.0, %v476
        %478 = vdwg.mxu0
        %v479 = vadd.f32 %v441, %v477
        %v480 = vld [vmem:[#allocation2 + $0x9] sm:$0xff]
        %s481 = scalar_lea.vmem [#allocation8], 256
        %v482 = vld [vmem:[%s481] sm:$0xff]
        %v483 = vld [vmem:[%s481 + $0x8] sm:$0xff]
        %v484 = vld [vmem:[%s481 + $0x10] sm:$0xff]
        %v485 = vld [vmem:[%s481 + $0x18] sm:$0xff]
        %v486 = vld [vmem:[%s481 + $0x20] sm:$0xff]
        %v487 = vld [vmem:[%s481 + $0x28] sm:$0xff]
        %v488 = vld [vmem:[%s481 + $0x30] sm:$0xff]
        %v489 = vld [vmem:[%s481 + $0x38] sm:$0xff]
        %v490 = vld [vmem:[%s481 + $0x40] sm:$0xff]
        %v491 = vld [vmem:[%s481 + $0x48] sm:$0xff]
        %v492 = vld [vmem:[%s481 + $0x50] sm:$0xff]
        %v493 = vld [vmem:[%s481 + $0x58] sm:$0xff]
        %v494 = vld [vmem:[%s481 + $0x60] sm:$0xff]
        %v495 = vld [vmem:[%s481 + $0x68] sm:$0xff]
        %v496 = vld [vmem:[%s481 + $0x70] sm:$0xff]
        %v497 = vld [vmem:[%s481 + $0x78] sm:$0xff]
        %498 = vmatpush.msra.mxu0 %v497
        %499 = vmatpush.msra.mxu0 %v496
        %500 = vmatpush.msra.mxu0 %v495
        %501 = vmatpush.msra.mxu0 %v494
        %502 = vmatpush.msra.mxu0 %v493
        %503 = vmatpush.msra.mxu0 %v492
        %504 = vmatpush.msra.mxu0 %v491
        %505 = vmatpush.msra.mxu0 %v490
        %506 = vmatpush.msra.mxu0 %v489
        %507 = vmatpush.msra.mxu0 %v488
        %508 = vmatpush.msra.mxu0 %v487
        %509 = vmatpush.msra.mxu0 %v486
        %510 = vmatpush.msra.mxu0 %v485
        %511 = vmatpush.msra.mxu0 %v484
        %512 = vmatpush.msra.mxu0 %v483
        %513 = vmatpush.msra.mxu0 %v482
        %514 = vmatmul.f32.gmra.mxu0 %v480
        %v515 = vpop.f32.mrf.mxu0
        %v516 = vadd.f32 0.0, %v515
        %517 = vdwg.mxu0
        %v518 = vadd.f32 %v479, %v516
        %v519 = vadd.f32 %v277, %v518
        %v520 = vmax.f32 %v519, 0.0
        %521 = vst [vmem:[%s274] sm:$0xff] %v520
        %s522 = sand.u32 %s141, 1
        %s523 = scalar_lea.sflag [#allocation5], %s522
        %s524 = sand.u32 %s141, 1
        %s525 = smul.addr %s524, 8
        %s526 = scalar_lea.vmem [#allocation9], %s525
        // Predicated region
        $region53: #{tpu_custom_call.1} parent=39 // pred_check
          %p527 = pneg %p151
        $region54: #{tpu_custom_call.1} parent=39 // pred_check_branch
          %529 = sbr.rel (%p527) target = $region56
        $region55: #{tpu_custom_call.1} parent=39 // pred_region
          %531 = vsyncadd %s523, 0
          %s532 = smul.addr %s23, 8
          %s533 = scalar_lea.hbm %s5, %s532
          %s535 = sshll.u32 %s526, 4
          %s536 = int_to_ptr.vmem [resolvable:$true] %s535
          %s537 = sshll.u32 %s533, 4
          %s538 = int_to_ptr.hbm [resolvable:$true] %s537
          %540 = dma.vmem_to_hbm [thread:$0]  %s536, 128, %s538, %s523
        $region56: #{tpu_custom_call.1} parent=39 // pred_fallthru
          _
      $region40: #{tpu_custom_call.1} parent=5 // pred_fallthru
        _
      %p541 = scmp.le.s32.totalorder 2, %s18
      // Predicated region
      $region57: #{tpu_custom_call.1} parent=5 // pred_check
        %p542 = pneg %p541
      $region58: #{tpu_custom_call.1} parent=5 // pred_check_branch
        %544 = sbr.rel (%p542) target = $region60
      $region59: #{tpu_custom_call.1} parent=5 // pred_region
        %s545 = ssub.s32 %s18, 2
        // Predicated region
        $region61: #{tpu_custom_call.1} parent=59 // pred_check
          %p546 = pneg %p157
        $region62: #{tpu_custom_call.1} parent=59 // pred_check_branch
          %548 = sbr.rel (%p546) target = $region64
        $region63: #{tpu_custom_call.1} parent=59 // pred_region
          %s549 = sand.u32 %s142, 1
          %s550 = scalar_lea.sflag [#allocation5], %s549
          %s551 = sand.u32 %s142, 1
          %s552 = smul.addr %s551, 8
          %s553 = scalar_lea.vmem [#allocation9], %s552
          %555 = dma.done %s550, 128
        $region64: #{tpu_custom_call.1} parent=59 // pred_fallthru
          _
      $region60: #{tpu_custom_call.1} parent=5 // pred_fallthru
        _
    $region6: #{tpu_custom_call.1} parent=1 // loop_footer
      %s22 = sadd.s32 1, %s18
    $region7: #{tpu_custom_call.1} parent=1 // loop_footer_branch
      %17 = sbr.rel target = $region3
    $region8: #{tpu_custom_call.1} parent=1 // loop_exit
      _
    %556 = vsyncpa [#allocation4], 1
    %s557 = scalar_lea.sflag [#allocation4], 1
    %558 = vsyncpa %s557, 1
    %559 = vsyncpa [#allocation7], 1
    %560 = vsyncpa [#allocation5], 1
    %s561 = scalar_lea.sflag [#allocation5], 1
    %562 = vsyncpa %s561, 1

</llo_original>
